<compile_context>
chip_gen: v7x
topology: tpu7x:2x2x1
jax: 0.10.0
libtpu: 0.0.40
codegen_flags: <defaults>
</compile_context>

<pallas_src>
import functools

import jax
import jax.numpy as jnp
from jax.experimental import pallas as pl
from jax.experimental.pallas import tpu as pltpu


def _round_up(x: int, m: int) -> int:
    return ((x + m - 1) // m) * m


def _cdiv(a: int, b: int) -> int:
    return -(-a // b)


def _choose_tile_k(in_features: int):
    """(TK, Kp): single K tile when it fits, else a no-waste divisor of Kp."""
    kp = _round_up(in_features, 128)
    if kp <= 1024:
        return kp, kp
    for tk in range(1024, 127, -128):
        if kp % tk == 0:
            return tk, kp
    return 512, _round_up(kp, 512)  # unreachable (128 always divides kp)


def _choose_tile_n(out_features: int):
    """(TN, Np): single N tile when it fits, else a no-waste divisor of Np."""
    np_ = _round_up(out_features, 128)
    if np_ <= 512:
        return np_, np_
    for tn in range(512, 127, -128):
        if np_ % tn == 0:
            return tn, np_
    return 256, _round_up(np_, 256)  # unreachable


def _choose_tile_m(batch: int):
    """(TM, Mp): cover B with as few (16-aligned) M tiles as possible."""
    if batch <= 512:
        tm = _round_up(batch, 16)
        return tm, tm
    gm = _cdiv(batch, 512)
    tm = _round_up(_cdiv(batch, gm), 16)
    return tm, _round_up(batch, tm)


def _sparse_linear_kernel(x_ref, w_ref, b_ref, o_ref):
    # x_ref: (TM, TK) bf16 activation tile
    # w_ref: (TK, TN) bf16 weight tile (pre-transposed to (in, out) layout)
    # b_ref: (1,  TN) f32 bias tile
    # o_ref: (TM, TN) f32 output tile, resident across the K grid axis
    k = pl.program_id(2)

    @pl.when(k == 0)
    def _():
        o_ref[...] = jnp.zeros_like(o_ref)

    o_ref[...] += jnp.dot(
        x_ref[...], w_ref[...], preferred_element_type=jnp.float32
    )

    @pl.when(k == pl.num_programs(2) - 1)
    def _():
        # Bias added exactly once, on the final K step.
        o_ref[...] = o_ref[...] + b_ref[...]


def prepare_sparse_layer_params(weight, bias):
    """One-time layout plumbing (do NOT call per forward):
         weight (out, in) f32 -> (Kp, Np) bf16, transposed + tile-padded
         bias   (out,)    f32 -> (1, Np)  f32, tile-padded
    """
    out_features, in_features = weight.shape
    _, np_ = _choose_tile_n(out_features)
    _, kp = _choose_tile_k(in_features)
    w_prep = jnp.pad(
        weight.T, ((0, kp - in_features), (0, np_ - out_features))
    ).astype(jnp.bfloat16)
    b_prep = jnp.pad(
        bias.reshape(1, out_features).astype(jnp.float32),
        ((0, 0), (0, np_ - out_features)),
    )
    return w_prep, b_prep


@functools.partial(jax.jit, static_argnames=("out_features",))
def sparse_layer_forward_prepared(x, w_prep, b_prep, *, out_features):
    """Forward of SparseLayer (train/COO path): x @ weight.T + bias.

    x:      (B, in_features) f32
    w_prep: (Kp, Np) bf16   -- from prepare_sparse_layer_params
    b_prep: (1, Np)  f32
    returns (B, out_features) f32
    """
    B, in_features = x.shape
    TN, Np = _choose_tile_n(out_features)
    TK, Kp = _choose_tile_k(in_features)
    TM, Mp = _choose_tile_m(B)
    assert w_prep.shape == (Kp, Np) and b_prep.shape == (1, Np)

    # Only the (small) activation is padded/cast per call.
    x_p = jnp.pad(x, ((0, Mp - B), (0, Kp - in_features))).astype(jnp.bfloat16)

    gm, gn, gk = Mp // TM, Np // TN, Kp // TK

    # v7x megacore: put the larger of the two parallel axes first so the
    # sharded axis has extent >= 2 whenever possible (no-op on v5e/v6e).
    if gn > gm:
        grid = (gn, gm, gk)
        x_map = lambda j, i, k: (i, k)
        w_map = lambda j, i, k: (k, j)
        b_map = lambda j, i, k: (0, j)
        o_map = lambda j, i, k: (i, j)
    else:
        grid = (gm, gn, gk)
        x_map = lambda i, j, k: (i, k)
        w_map = lambda i, j, k: (k, j)
        b_map = lambda i, j, k: (0, j)
        o_map = lambda i, j, k: (i, j)

    # Double-buffered bf16 input tiles + (double-buffered) f32 output tile.
    tile_bytes = (
        2 * (TM * TK * 2)      # x
        + 2 * (TK * TN * 2)    # W
        + 2 * (1 * TN * 4)     # bias
        + 2 * (TM * TN * 4)    # out
    )
    vmem_limit = int(min(max(2 * tile_bytes, 8 << 20), 32 << 20))

    cost = pl.CostEstimate(
        flops=2 * Mp * Kp * Np,
        transcendentals=0,
        bytes_accessed=(
            2 * Mp * Kp * gn       # x bf16, re-read once per N tile
            + 2 * Kp * Np * gm     # W bf16, re-read once per M tile
            + 4 * Np * gm          # bias
            + 4 * Mp * Np          # out f32
        ),
    )

    out_padded = pl.pallas_call(
        _sparse_linear_kernel,
        out_shape=jax.ShapeDtypeStruct((Mp, Np), jnp.float32),
        grid_spec=pltpu.PrefetchScalarGridSpec(
            num_scalar_prefetch=0,
            grid=grid,
            in_specs=[
                pl.BlockSpec((TM, TK), x_map),   # x (bf16)
                pl.BlockSpec((TK, TN), w_map),   # W^T (bf16)
                pl.BlockSpec((1, TN), b_map),    # bias (f32)
            ],
            out_specs=pl.BlockSpec((TM, TN), o_map),
        ),
        compiler_params=pltpu.CompilerParams(
            dimension_semantics=("parallel", "parallel", "arbitrary"),
            vmem_limit_bytes=vmem_limit,
        ),
        cost_estimate=cost,
    )(x_p, w_prep, b_prep)

    return out_padded[:B, :out_features]


def sparse_layer_forward(x, weight, bias):
    """Convenience wrapper (prepares weight per call). For repeated calls,
    call prepare_sparse_layer_params once and use sparse_layer_forward_prepared."""
    w_prep, b_prep = prepare_sparse_layer_params(weight, bias)
    return sparse_layer_forward_prepared(
        x, w_prep, b_prep, out_features=weight.shape[0]
    )


def make_sparse_layer_params(key, in_features, out_features):
    """Deterministic init mirroring SparseLayer.__init__:
       weight ~ U(-1, 1), entries with |w| <= 0.2 set to 0; bias ~ U(0, 1)."""
    kw, kb = jax.random.split(key)
    weight = jax.random.uniform(
        kw, (out_features, in_features), dtype=jnp.float32, minval=-1.0, maxval=1.0
    )
    weight = jnp.where(jnp.abs(weight) <= 0.2, 0.0, weight)
    bias = jax.random.uniform(kb, (out_features,), dtype=jnp.float32)
    return weight, bias


def _reference_bf16(x, weight, bias):
    # Same arithmetic as the kernel: bf16 operands, f32 accumulation.
    return (
        jnp.dot(
            x.astype(jnp.bfloat16),
            weight.T.astype(jnp.bfloat16),
            preferred_element_type=jnp.float32,
        )
        + bias
    )


if __name__ == "__main__":
    key = jax.random.PRNGKey(0)
    k_param, k_x = jax.random.split(key)

    # Small shapes consistent with the module's linear forward.
    batch = 8
    in_features = 32
    out_features = 16

    weight, bias = make_sparse_layer_params(k_param, in_features, out_features)
    x = jax.random.normal(k_x, (batch, in_features), dtype=jnp.float32)

    # Weight prepared ONCE (transpose + pad + bf16 cast), then forward.
    w_prep, b_prep = prepare_sparse_layer_params(weight, bias)
    out = sparse_layer_forward_prepared(x, w_prep, b_prep, out_features=out_features)
    out = jax.block_until_ready(out)

    ref = _reference_bf16(x, weight, bias)
    assert out.shape == (batch, out_features)
    assert jnp.allclose(out, ref, atol=1e-2, rtol=1e-2), "mismatch vs reference"

    # Larger, tile-spanning shape: multiple K steps exercise the resident
    # output accumulator path and the grid-ordering / padding logic.
    k2, k3 = jax.random.split(k_x)
    B2, IN2, OUT2 = 300, 1408, 384   # Kp=1408 -> TK=704, 2 K tiles, no pad waste
    w2, b2 = make_sparse_layer_params(k2, IN2, OUT2)
    x2 = jax.random.normal(k3, (B2, IN2), dtype=jnp.float32)
    w2_prep, b2_prep = prepare_sparse_layer_params(w2, b2)
    out2 = jax.block_until_ready(
        sparse_layer_forward_prepared(x2, w2_prep, b2_prep, out_features=OUT2)
    )
    ref2 = _reference_bf16(x2, w2, b2)
    assert out2.shape == (B2, OUT2)
    assert jnp.allclose(out2, ref2, atol=2e-2, rtol=2e-2), "mismatch vs reference (large)"

    # TODO(synk): eval-mode CSR path (torch.sparse.mm on true sparse storage) and
    # the pruning / format-switching utilities are host-side bookkeeping with no
    # Pallas analogue; the densified matmul above covers the forward semantics.

    print("KERNEL_OK")
</pallas_src>

<mosaic_0001>
module attributes {stable_mosaic.version = 11 : i64} {
  func.func @_sparse_linear_kernel(%arg0: i32, %arg1: i32, %arg2: i32, %arg3: memref<16x128xbf16, #tpu.memory_space<vmem>>, %arg4: memref<128x128xbf16, #tpu.memory_space<vmem>>, %arg5: memref<1x128xf32, #tpu.memory_space<vmem>>, %arg6: memref<16x128xf32, #tpu.memory_space<vmem>>) attributes {dimension_semantics = [#tpu.dimension_semantics<parallel>, #tpu.dimension_semantics<parallel>, #tpu.dimension_semantics<arbitrary>], iteration_bounds = array<i64: 1, 1, 1>, scalar_prefetch = 0 : i64, scratch_operands = 0 : i64, tpu.core_type = #tpu.core_type<tc>, window_params = [{transform_indices = @transform_0, window_bounds = array<i64: 16, 128>}, {transform_indices = @transform_1, window_bounds = array<i64: 128, 128>}, {transform_indices = @transform_2, window_bounds = array<i64: 1, 128>}, {transform_indices = @transform_3, window_bounds = array<i64: 16, 128>}]} {
    %c0_i32 = arith.constant 0 : i32
    %0 = arith.cmpi eq, %arg2, %c0_i32 : i32
    %1 = arith.extui %0 : i1 to i32
    %c0_i32_0 = arith.constant 0 : i32
    %2 = arith.cmpi ne, %1, %c0_i32_0 : i32
    scf.if %2 {
      %cst_10 = arith.constant 0.000000e+00 : f32
      %12 = vector.broadcast %cst_10 : f32 to vector<16x128xf32>
      %c0_11 = arith.constant 0 : index
      %c0_12 = arith.constant 0 : index
      %13 = vector.load %arg6[%c0_11, %c0_12] : memref<16x128xf32, #tpu.memory_space<vmem>>, vector<16x128xf32>
      tpu.vector_store %arg6[%c0_11, %c0_12], %12 {strides = array<i32>} : memref<16x128xf32, #tpu.memory_space<vmem>>, vector<16x128xf32>,
    } else {
    }
    %c0 = arith.constant 0 : index
    %c0_1 = arith.constant 0 : index
    %3 = vector.load %arg6[%c0, %c0_1] : memref<16x128xf32, #tpu.memory_space<vmem>>, vector<16x128xf32>
    %c0_2 = arith.constant 0 : index
    %c0_3 = arith.constant 0 : index
    %4 = vector.load %arg3[%c0_2, %c0_3] : memref<16x128xbf16, #tpu.memory_space<vmem>>, vector<16x128xbf16>
    %c0_4 = arith.constant 0 : index
    %c0_5 = arith.constant 0 : index
    %5 = vector.load %arg4[%c0_4, %c0_5] : memref<128x128xbf16, #tpu.memory_space<vmem>>, vector<128x128xbf16>
    %cst = arith.constant dense<0.000000e+00> : vector<16x128xf32>
    %6 = tpu.matmul %4, %5, %cst {dimension_numbers = #tpu.dot_dimension_numbers<[1], [0], [0], [1], [0, 0, 1, 1], [], []>} : vector<16x128xbf16>, vector<128x128xbf16>, vector<16x128xf32> -> vector<16x128xf32>
    %7 = arith.addf %3, %6 : vector<16x128xf32>
    %c0_6 = arith.constant 0 : index
    %c0_7 = arith.constant 0 : index
    %8 = vector.load %arg6[%c0_6, %c0_7] : memref<16x128xf32, #tpu.memory_space<vmem>>, vector<16x128xf32>
    tpu.vector_store %arg6[%c0_6, %c0_7], %7 {strides = array<i32>} : memref<16x128xf32, #tpu.memory_space<vmem>>, vector<16x128xf32>,
    %c0_i32_8 = arith.constant 0 : i32
    %9 = arith.cmpi eq, %arg2, %c0_i32_8 : i32
    %10 = arith.extui %9 : i1 to i32
    %c0_i32_9 = arith.constant 0 : i32
    %11 = arith.cmpi ne, %10, %c0_i32_9 : i32
    scf.if %11 {
      %c0_10 = arith.constant 0 : index
      %c0_11 = arith.constant 0 : index
      %12 = vector.load %arg6[%c0_10, %c0_11] : memref<16x128xf32, #tpu.memory_space<vmem>>, vector<16x128xf32>
      %c0_12 = arith.constant 0 : index
      %c0_13 = arith.constant 0 : index
      %13 = vector.load %arg5[%c0_12, %c0_13] : memref<1x128xf32, #tpu.memory_space<vmem>>, vector<1x128xf32>
      %14 = vector.broadcast %13 : vector<1x128xf32> to vector<16x128xf32>
      %15 = arith.addf %12, %14 : vector<16x128xf32>
      %c0_14 = arith.constant 0 : index
      %c0_15 = arith.constant 0 : index
      %16 = vector.load %arg6[%c0_14, %c0_15] : memref<16x128xf32, #tpu.memory_space<vmem>>, vector<16x128xf32>
      tpu.vector_store %arg6[%c0_14, %c0_15], %15 {strides = array<i32>} : memref<16x128xf32, #tpu.memory_space<vmem>>, vector<16x128xf32>,
    } else {
    }
    return
  }
  func.func @transform_0(%arg0: i32, %arg1: i32, %arg2: i32) -> (i32, i32) {
    %c0_i32 = arith.constant 0 : i32
    return %arg0, %arg2 : i32, i32
  }
  func.func @transform_1(%arg0: i32, %arg1: i32, %arg2: i32) -> (i32, i32) {
    %c0_i32 = arith.constant 0 : i32
    return %arg2, %arg1 : i32, i32
  }
  func.func @transform_2(%arg0: i32, %arg1: i32, %arg2: i32) -> (i32, i32) {
    %c0_i32 = arith.constant 0 : i32
    %c0_i32_0 = arith.constant 0 : i32
    return %c0_i32, %arg1 : i32, i32
  }
  func.func @transform_3(%arg0: i32, %arg1: i32, %arg2: i32) -> (i32, i32) {
    %c0_i32 = arith.constant 0 : i32
    return %arg0, %arg1 : i32, i32
  }
}

</mosaic_0001>

<llo_original>
// kernel: sparse_layer_forward_prepared.1
$region0: #{sparse_layer_forward_prepared.1}
  #allocation0 [shape = 'u32[]', space=smem, size = 0x4, offset = 0x4, fixed_abs, tag = 'smem constant byte address 0x4 - core index']
  #allocation1 [shape = 'u32[144,128]{1,0:T(1,128)}', space=vmem, size = 0x12000, scoped, tag = 'internal scratch']
  %s0 = inlined_call_operand.vmem [shape: bf16[16,128], index: 0, kind: input, shape index: {}]
  %s1 = inlined_call_operand.hbm [shape: bf16[128,128], index: 1, kind: input, shape index: {}]
  %s2 = inlined_call_operand.vmem [shape: f32[1,128], index: 2, kind: input, shape index: {}]
  %s3 = inlined_call_operand.vmem [shape: f32[16,128], index: 3, kind: output, shape index: {}]
  %s4 = sld [smem:[#allocation0]]
  $region34: #{sparse_layer_forward_prepared.1} parent=0
    _
  %s6 = ssub.s32 1, %s4
  %s7 = scalar_select 0, %s6, %s4
  $region1: #{sparse_layer_forward_prepared.1} parent=0
    #allocation2 [shape = 'u8[32768]{0}', space=vmem, size = 0x8000, scoped, tag = 'input window, operand 1, single buffered']
    #allocation3 [shape = 's32[1]{0}', space=sflag, size = 0x4, scoped, tag = 'scoped memory for sparse_layer_forward_prepared.1']
    %8 = vsyncpa [#allocation3], 0
    // Predicated region
    $region2: #{sparse_layer_forward_prepared.1} parent=1 // pred_check
      _
    $region3: #{sparse_layer_forward_prepared.1} parent=1 // pred_check_branch
      %10 = sbr.rel (0) target = $region5
    $region4: #{sparse_layer_forward_prepared.1} parent=1 // pred_region
      _
    $region5: #{sparse_layer_forward_prepared.1} parent=1 // pred_fallthru
      _
    // Predicated region
    $region6: #{sparse_layer_forward_prepared.1} parent=1 // pred_check
      _
    $region7: #{sparse_layer_forward_prepared.1} parent=1 // pred_check_branch
      %12 = sbr.rel (0) target = $region9
    $region8: #{sparse_layer_forward_prepared.1} parent=1 // pred_region
      %s14 = ssub.s32 1024, 1024
      %15 = vsyncadd [#allocation3], %s14
      %s16 = sshll.u32 [#allocation2], 4
      %s17 = int_to_ptr.vmem [resolvable:$true] %s16
      %22 = dma.hbm_to_vmem [thread:$0]  %s1, 1024, %s17, [#allocation3], 64, 64, 4
    $region9: #{sparse_layer_forward_prepared.1} parent=1 // pred_fallthru
      _
    // Predicated region
    $region10: #{sparse_layer_forward_prepared.1} parent=1 // pred_check
      _
    $region11: #{sparse_layer_forward_prepared.1} parent=1 // pred_check_branch
      %24 = sbr.rel (0) target = $region13
    $region12: #{sparse_layer_forward_prepared.1} parent=1 // pred_region
      _
    $region13: #{sparse_layer_forward_prepared.1} parent=1 // pred_fallthru
      _
    // Predicated region
    $region14: #{sparse_layer_forward_prepared.1} parent=1 // pred_check
      _
    $region15: #{sparse_layer_forward_prepared.1} parent=1 // pred_check_branch
      %26 = sbr.rel (0) target = $region17
    $region16: #{sparse_layer_forward_prepared.1} parent=1 // pred_region
      %27 = dma.done [#allocation3], 1024
    $region17: #{sparse_layer_forward_prepared.1} parent=1 // pred_fallthru
      _
    %p29 = scmp.eq.s32.totalorder 0, 0
    // Predicated region
    $region18: #{sparse_layer_forward_prepared.1} parent=1 // pred_check
      %p30 = pneg %p29
    $region19: #{sparse_layer_forward_prepared.1} parent=1 // pred_check_branch
      %32 = sbr.rel (%p30) target = $region21
    $region20: #{sparse_layer_forward_prepared.1} parent=1 // pred_region
      %33 = vst [vmem:[%s3] sm:$0xff] 0.0
      %34 = vst [vmem:[%s3 + $0x8] sm:$0xff] 0.0
    $region21: #{sparse_layer_forward_prepared.1} parent=1 // pred_fallthru
      _
    %v35 = vld [vmem:[%s3] sm:$0xff]
    %v36 = vld [vmem:[%s3 + $0x8] sm:$0xff]
    %v37 = vld [vmem:[%s0] sm:$0xf]
    %v38 = vld [vmem:[%s0 + $0x4] sm:$0xf]
    %v39 = vld [vmem:[#allocation2] sm:$0xf]
    %v40 = vld [vmem:[#allocation2 + $0x4] sm:$0xf]
    %v41 = vld [vmem:[#allocation2 + $0x8] sm:$0xf]
    %v42 = vld [vmem:[#allocation2 + $0xc] sm:$0xf]
    %v43 = vld [vmem:[#allocation2 + $0x10] sm:$0xf]
    %v44 = vld [vmem:[#allocation2 + $0x14] sm:$0xf]
    %v45 = vld [vmem:[#allocation2 + $0x18] sm:$0xf]
    %v46 = vld [vmem:[#allocation2 + $0x1c] sm:$0xf]
    %v47 = vld [vmem:[#allocation2 + $0x20] sm:$0xf]
    %v48 = vld [vmem:[#allocation2 + $0x24] sm:$0xf]
    %v49 = vld [vmem:[#allocation2 + $0x28] sm:$0xf]
    %v50 = vld [vmem:[#allocation2 + $0x2c] sm:$0xf]
    %v51 = vld [vmem:[#allocation2 + $0x30] sm:$0xf]
    %v52 = vld [vmem:[#allocation2 + $0x34] sm:$0xf]
    %v53 = vld [vmem:[#allocation2 + $0x38] sm:$0xf]
    %v54 = vld [vmem:[#allocation2 + $0x3c] sm:$0xf]
    %v57 = vunpack.c.l.b16 %v37
    %v58 = vunpack.c.l.b16 %v38
    %v59 = vpack.c.b16 %v58, %v57
    %v77 = vunpack.c.l.b16 %v39
    %v78 = vunpack.c.l.b16 %v40
    %v79 = vunpack.c.l.b16 %v41
    %v80 = vunpack.c.l.b16 %v42
    %v81 = vunpack.c.l.b16 %v43
    %v82 = vunpack.c.l.b16 %v44
    %v83 = vunpack.c.l.b16 %v45
    %v84 = vunpack.c.l.b16 %v46
    %v85 = vunpack.c.l.b16 %v47
    %v86 = vunpack.c.l.b16 %v48
    %v87 = vunpack.c.l.b16 %v49
    %v88 = vunpack.c.l.b16 %v50
    %v89 = vunpack.c.l.b16 %v51
    %v90 = vunpack.c.l.b16 %v52
    %v91 = vunpack.c.l.b16 %v53
    %v92 = vunpack.c.l.b16 %v54
    %v93 = vpack.c.b16 %v78, %v77
    %v94 = vpack.c.b16 %v80, %v79
    %v95 = vpack.c.b16 %v82, %v81
    %v96 = vpack.c.b16 %v84, %v83
    %v97 = vpack.c.b16 %v86, %v85
    %v98 = vpack.c.b16 %v88, %v87
    %v99 = vpack.c.b16 %v90, %v89
    %v100 = vpack.c.b16 %v92, %v91
    %109 = vmatprep.subr.bf16.mxu0 0
    %110 = vmatpush1.bf16.msra.mxu0 %v93
    %111 = vmatprep.subr.bf16.mxu0 0
    %112 = vmatpush1.bf16.msra.mxu0 %v94
    %113 = vmatprep.subr.bf16.mxu0 0
    %114 = vmatpush1.bf16.msra.mxu0 %v95
    %115 = vmatprep.subr.bf16.mxu0 0
    %116 = vmatpush1.bf16.msra.mxu0 %v96
    %117 = vmatprep.subr.bf16.mxu0 0
    %118 = vmatpush1.bf16.msra.mxu0 %v97
    %119 = vmatprep.subr.bf16.mxu0 0
    %120 = vmatpush1.bf16.msra.mxu0 %v98
    %121 = vmatprep.subr.bf16.mxu0 0
    %122 = vmatpush1.bf16.msra.mxu0 %v99
    %123 = vmatprep.subr.bf16.mxu0 0
    %124 = vmatpush1.bf16.msra.mxu0 %v100
    %125 = vmatprep.subr.bf16.mxu0 0
    %126 = vmatpush1.bf16.msra.mxu0 0
    %127 = vmatprep.subr.bf16.mxu0 0
    %128 = vmatpush1.bf16.msra.mxu0 0
    %129 = vmatprep.subr.bf16.mxu0 0
    %130 = vmatpush1.bf16.msra.mxu0 0
    %131 = vmatprep.subr.bf16.mxu0 0
    %132 = vmatpush1.bf16.msra.mxu0 0
    %133 = vmatprep.subr.bf16.mxu0 0
    %134 = vmatpush1.bf16.msra.mxu0 0
    %135 = vmatprep.subr.bf16.mxu0 0
    %136 = vmatpush1.bf16.msra.mxu0 0
    %137 = vmatprep.subr.bf16.mxu0 0
    %138 = vmatpush1.bf16.msra.mxu0 0
    %139 = vmatprep.subr.bf16.mxu0 0
    %140 = vmatpush1.bf16.msra.mxu0 0
    %141 = vmatprep.mubr.bf16.mxu0 0
    %142 = vmatmul.mubr.bf16.gmra.mrb[0].mxu0 %v59
    %v143 = vpop.f32.mrb[0].mxu0
    %v144 = vadd.f32 0.0, %v143
    %v145 = vpop.f32.mrb[0].mxu0
    %v146 = vpop.f32.mrb[0].mxu0
    %v147 = vadd.f32 0.0, %v146
    %v148 = vpop.f32.mrb[0].mxu0
    %149 = vdwg.mxu0
    %v150 = vadd.f32 %v35, %v144
    %v151 = vadd.f32 %v36, %v147
    %152 = vst [vmem:[%s3] sm:$0xff] %v150
    %153 = vst [vmem:[%s3 + $0x8] sm:$0xff] %v151
    // Predicated region
    $region22: #{sparse_layer_forward_prepared.1} parent=1 // pred_check
      %p154 = pneg %p29
    $region23: #{sparse_layer_forward_prepared.1} parent=1 // pred_check_branch
      %156 = sbr.rel (%p154) target = $region25
    $region24: #{sparse_layer_forward_prepared.1} parent=1 // pred_region
      %v157 = vld [vmem:[%s3] sm:$0xff]
      %v158 = vld [vmem:[%s3 + $0x8] sm:$0xff]
      %v159 = vld [vmem:[%s2] sm:$0x1]
      %v161 = vlaneseq
      %v162 = vshrl.u32 %v161, 7
      %v163 = vsub.s32 0, %v162
      %v164 = vrot.slane %v159, %v163
      %v166 = vadd.f32 %v157, %v164
      %v167 = vadd.f32 %v158, %v164
      %168 = vst [vmem:[%s3] sm:$0xff] %v166
      %169 = vst [vmem:[%s3 + $0x8] sm:$0xff] %v167
    $region25: #{sparse_layer_forward_prepared.1} parent=1 // pred_fallthru
      _
    // Predicated region
    $region26: #{sparse_layer_forward_prepared.1} parent=1 // pred_check
      _
    $region27: #{sparse_layer_forward_prepared.1} parent=1 // pred_check_branch
      %171 = sbr.rel (0) target = $region29
    $region28: #{sparse_layer_forward_prepared.1} parent=1 // pred_region
      _
    $region29: #{sparse_layer_forward_prepared.1} parent=1 // pred_fallthru
      _
    // Predicated region
    $region30: #{sparse_layer_forward_prepared.1} parent=1 // pred_check
      _
    $region31: #{sparse_layer_forward_prepared.1} parent=1 // pred_check_branch
      %173 = sbr.rel (0) target = $region33
    $region32: #{sparse_layer_forward_prepared.1} parent=1 // pred_region
      _
    $region33: #{sparse_layer_forward_prepared.1} parent=1 // pred_fallthru
      _
    %174 = vsyncpa [#allocation3], 1

</llo_original>
